<compile_context>
chip_gen: v5e
topology: v5e:2x2
jax: 0.10.0
libtpu: 0.0.40
codegen_flags: <defaults>
</compile_context>

<pallas_src>
import numpy as np

import jax
import jax.numpy as jnp
from jax.experimental import pallas as pl
from jax.experimental.pallas import tpu as pltpu

_LANE = 128


def _round_up(n, m):
    return ((n + m - 1) // m) * m


def _make_mlp_kernel(n_layers, compute_dtype):
    """Kernel args: (x_ref, w0, b0, ..., w_{L-1}, b_{L-1}, o_ref).

    Hidden layers run on the MXU (matmul + bias + ReLU, f32 accumulation); the final
    (hidden -> 1) layer is a transposed MXU dot_general producing a lane-dense (1, bm)
    result written straight to the output block.
    """

    def kernel(x_ref, *refs):
        o_ref = refs[-1]
        params = refs[:-1]

        h = x_ref[...]  # (bm, in_dim), compute dtype

        # Hidden layers: MXU matmul (f32 accumulation) + bias + ReLU.
        # Dropout(p=0.1) is identity at inference.
        for i in range(n_layers - 1):
            w = params[2 * i][...]        # (in_i, out_i), compute dtype; read once per step
            b = params[2 * i + 1][...]    # (1, out_i), f32
            h = jnp.dot(h, w, preferred_element_type=jnp.float32) + b
            h = jnp.maximum(h, 0.0).astype(compute_dtype)

        # Final (hidden -> 1) layer: (1, H) . (bm, H)^T -> (1, bm) on the MXU.
        # Result already has batch on lanes -> lane-dense store, no sublane->lane relayout.
        w_last = params[2 * (n_layers - 1)][...]      # (1, hidden_last), compute dtype
        b_last = params[2 * (n_layers - 1) + 1][...]  # (1, 1), f32
        out = jax.lax.dot_general(
            w_last, h,
            dimension_numbers=(((1,), (1,)), ((), ())),
            preferred_element_type=jnp.float32)       # (1, bm)
        o_ref[...] = (out + b_last[0, 0]).astype(o_ref.dtype)

    return kernel


def _per_row_vmem_bytes(dims, x_bytes, compute_bytes):
    """Rough per-batch-row VMEM footprint of one grid step (lane-padded)."""
    pad = lambda d: _round_up(max(int(d), 1), _LANE)
    # Double-buffered x input tile.
    per_row = 2 * pad(dims[0]) * x_bytes
    # Widest live matmul pair: compute-dtype input operand + f32 accumulator output.
    pair = 0
    for i in range(len(dims) - 1):
        pair = max(pair, pad(dims[i]) * compute_bytes + pad(dims[i + 1]) * 4)
    per_row += pair
    # Post-bias/ReLU f32 value + its compute-dtype copy for the widest activation.
    per_row += max(pad(d) for d in dims) * (4 + compute_bytes)
    # Double-buffered f32 output element.
    per_row += 2 * 4
    return per_row


def _choose_block_m(B, dims, x_bytes, compute_bytes, *, target_bm=4096,
                    vmem_tile_budget_bytes=20 * 1024 * 1024):
    """Pick a batch tile: as large as the VMEM budget allows, multiple of 128,
    and small enough that the grid has >= 2 steps when the batch allows it (v7x: 2 TCs)."""
    per_row = _per_row_vmem_bytes(dims, x_bytes, compute_bytes)
    bm_cap = max(_LANE, (vmem_tile_budget_bytes // per_row) // _LANE * _LANE)
    bm = min(_round_up(max(target_bm, _LANE), _LANE), bm_cap)
    half_batch = _round_up(pl.cdiv(max(B, 1), 2), _LANE)
    bm = max(_LANE, min(bm, half_batch))
    return bm, per_row


def mlp_forward(x, weights, biases, *, compute_dtype=jnp.bfloat16, target_block_m=4096):
    """Run the MLP forward pass.

    x:        (B, input_dim) float32
    weights:  list of (in_i, out_i) float32 arrays (transposed vs torch (out, in) layout)
    biases:   list of (1, out_i) float32 arrays
    returns:  (B,) float32   (output_dim == 1, squeezed like torch .squeeze(-1))
    """
    B, in_dim = x.shape
    n_layers = len(weights)
    assert n_layers >= 1
    assert weights[-1].shape[1] == 1, "kernel specializes the final layer to output_dim == 1"

    if B == 0:
        return jnp.zeros((0,), jnp.float32)

    dims = [in_dim] + [int(w.shape[1]) for w in weights]
    x_bytes = np.dtype(compute_dtype).itemsize
    compute_bytes = x_bytes

    bm, per_row = _choose_block_m(B, dims, x_bytes, compute_bytes, target_bm=target_block_m)
    B_pad = _round_up(B, bm)
    if B_pad != B:
        x = jnp.pad(x, ((0, B_pad - B), (0, 0)))
    x = x.astype(compute_dtype)

    kernel = _make_mlp_kernel(n_layers, compute_dtype)

    # x tiled over the batch; weights/biases are tiny -> full-array blocks with constant
    # index maps (resident across the batch grid).
    in_specs = [pl.BlockSpec((bm, in_dim), lambda i: (i, 0))]
    args = [x]
    for li, (w, b) in enumerate(zip(weights, biases)):
        if li == n_layers - 1:
            w = w.T  # final layer passed as (1, hidden_last) for the transposed MXU dot
        w = w.astype(compute_dtype)
        b = b.astype(jnp.float32)
        in_specs.append(pl.BlockSpec(w.shape, lambda i: (0, 0)))
        in_specs.append(pl.BlockSpec(b.shape, lambda i: (0, 0)))
        args.append(w)
        args.append(b)

    # Lane-dense 2-D output slab: (1, B_pad) tiled (1, bm) along lanes.
    out_spec = pl.BlockSpec((1, bm), lambda i: (0, i))

    # Advisory cost so XLA can overlap the custom call with neighbors.
    flops = 2 * B_pad * sum(dims[i] * dims[i + 1] for i in range(len(dims) - 1))
    bytes_accessed = (B_pad * in_dim * x_bytes
                      + sum(int(w.size) for w in weights) * compute_bytes
                      + sum(int(b.size) for b in biases) * 4
                      + B_pad * 4)

    # Explicit scoped-VMEM limit: v5e's default is only 16 MiB; keep >= 32 MiB (safe on
    # v6e/v7x too) and grow with the actual tile footprint if needed.
    weight_bytes = sum(_round_up(int(w.shape[0]), 8) * _round_up(int(w.shape[1]), _LANE)
                       for w in weights) * compute_bytes
    needed = per_row * bm + 2 * weight_bytes + (4 << 20)
    vmem_limit = int(max(32 << 20, min(needed, 96 << 20)))

    out = pl.pallas_call(
        kernel,
        out_shape=jax.ShapeDtypeStruct((1, B_pad), jnp.float32),
        grid_spec=pltpu.PrefetchScalarGridSpec(
            num_scalar_prefetch=0,
            grid=(B_pad // bm,),
            in_specs=in_specs,
            out_specs=out_spec,
        ),
        compiler_params=pltpu.CompilerParams(
            dimension_semantics=("parallel",),
            vmem_limit_bytes=vmem_limit,
        ),
        cost_estimate=pl.CostEstimate(
            flops=flops, transcendentals=0, bytes_accessed=bytes_accessed),
    )(*args)

    return out[0, :B]


def init_mlp_params(key, input_dim, hidden_dims, output_dim=1):
    """Deterministic init mimicking torch.nn.Linear (U[-1/sqrt(fan_in), 1/sqrt(fan_in)]).

    Returns weights as (in, out) — transposed relative to torch's (out, in) storage —
    and biases as (1, out).
    """
    dims = [input_dim] + list(hidden_dims) + [output_dim]
    weights, biases = [], []
    for i in range(len(dims) - 1):
        fan_in, fan_out = dims[i], dims[i + 1]
        key, wk, bk = jax.random.split(key, 3)
        bound = 1.0 / jnp.sqrt(jnp.float32(fan_in))
        w = jax.random.uniform(wk, (fan_in, fan_out), jnp.float32, -bound, bound)
        b = jax.random.uniform(bk, (1, fan_out), jnp.float32, -bound, bound)
        weights.append(w)
        biases.append(b)
    return weights, biases


def mlp_reference(x, weights, biases):
    """Pure-JAX f32 reference for correctness checking."""
    h = x
    n = len(weights)
    for i, (w, b) in enumerate(zip(weights, biases)):
        h = h @ w + b
        if i < n - 1:
            h = jnp.maximum(h, 0.0)
    return h[:, 0]


if __name__ == "__main__":
    key = jax.random.PRNGKey(0)

    # Small shapes consistent with the module: x is (batch, input_dim).
    batch = 16
    input_dim = 32
    hidden_dims = [64, 32]
    output_dim = 1

    key, xk, pk = jax.random.split(key, 3)
    x = jax.random.normal(xk, (batch, input_dim), jnp.float32)
    weights, biases = init_mlp_params(pk, input_dim, hidden_dims, output_dim)

    ref = mlp_reference(x, weights, biases)

    # f32 compute path: tight tolerance vs. the pure-JAX reference.
    out_f32 = jax.block_until_ready(
        mlp_forward(x, weights, biases, compute_dtype=jnp.float32))
    assert out_f32.shape == (batch,), out_f32.shape
    assert jnp.allclose(out_f32, ref, atol=1e-4, rtol=1e-4), "f32 mismatch vs reference"

    # bf16 streamed path (default): loosened tolerance vs. the f32 reference.
    out_bf16 = jax.block_until_ready(mlp_forward(x, weights, biases))
    assert out_bf16.shape == (batch,), out_bf16.shape
    assert jnp.allclose(out_bf16, ref, atol=5e-2, rtol=5e-2), "bf16 mismatch vs reference"

    print("KERNEL_OK")
</pallas_src>

<mosaic_0001>
module attributes {stable_mosaic.version = 11 : i64} {
  func.func @kernel(%arg0: i32, %arg1: memref<128x32xf32, #tpu.memory_space<vmem>>, %arg2: memref<32x64xf32, #tpu.memory_space<vmem>>, %arg3: memref<1x64xf32, #tpu.memory_space<vmem>>, %arg4: memref<64x32xf32, #tpu.memory_space<vmem>>, %arg5: memref<1x32xf32, #tpu.memory_space<vmem>>, %arg6: memref<1x32xf32, #tpu.memory_space<vmem>>, %arg7: memref<1x1xf32, #tpu.memory_space<vmem>>, %arg8: memref<1x128xf32, #tpu.memory_space<vmem>>) attributes {dimension_semantics = [#tpu.dimension_semantics<parallel>], iteration_bounds = array<i64: 1>, scalar_prefetch = 0 : i64, scratch_operands = 0 : i64, tpu.core_type = #tpu.core_type<tc>, window_params = [{transform_indices = @transform_0, window_bounds = array<i64: 128, 32>}, {pipeline_mode = #tpu.pipeline_mode<synchronous>, transform_indices = @transform_1, window_bounds = array<i64: 32, 64>}, {pipeline_mode = #tpu.pipeline_mode<synchronous>, transform_indices = @transform_2, window_bounds = array<i64: 1, 64>}, {pipeline_mode = #tpu.pipeline_mode<synchronous>, transform_indices = @transform_3, window_bounds = array<i64: 64, 32>}, {pipeline_mode = #tpu.pipeline_mode<synchronous>, transform_indices = @transform_4, window_bounds = array<i64: 1, 32>}, {pipeline_mode = #tpu.pipeline_mode<synchronous>, transform_indices = @transform_5, window_bounds = array<i64: 1, 32>}, {pipeline_mode = #tpu.pipeline_mode<synchronous>, transform_indices = @transform_6, window_bounds = array<i64: 1, 1>}, {transform_indices = @transform_7, window_bounds = array<i64: 1, 128>}]} {
    %c0 = arith.constant 0 : index
    %c0_0 = arith.constant 0 : index
    %0 = vector.load %arg1[%c0, %c0_0] : memref<128x32xf32, #tpu.memory_space<vmem>>, vector<128x32xf32>
    %c0_1 = arith.constant 0 : index
    %c0_2 = arith.constant 0 : index
    %1 = vector.load %arg2[%c0_1, %c0_2] : memref<32x64xf32, #tpu.memory_space<vmem>>, vector<32x64xf32>
    %c0_3 = arith.constant 0 : index
    %c0_4 = arith.constant 0 : index
    %2 = vector.load %arg3[%c0_3, %c0_4] : memref<1x64xf32, #tpu.memory_space<vmem>>, vector<1x64xf32>
    %cst = arith.constant dense<0.000000e+00> : vector<128x64xf32>
    %3 = tpu.matmul %0, %1, %cst {dimension_numbers = #tpu.dot_dimension_numbers<[1], [0], [0], [1], [0, 0, 1, 1], [], []>} : vector<128x32xf32>, vector<32x64xf32>, vector<128x64xf32> -> vector<128x64xf32>
    %4 = vector.broadcast %2 : vector<1x64xf32> to vector<128x64xf32>
    %5 = arith.addf %3, %4 : vector<128x64xf32>
    %cst_5 = arith.constant 0.000000e+00 : f32
    %6 = vector.broadcast %cst_5 : f32 to vector<128x64xf32>
    %7 = arith.maximumf %5, %6 : vector<128x64xf32>
    %c0_6 = arith.constant 0 : index
    %c0_7 = arith.constant 0 : index
    %8 = vector.load %arg4[%c0_6, %c0_7] : memref<64x32xf32, #tpu.memory_space<vmem>>, vector<64x32xf32>
    %c0_8 = arith.constant 0 : index
    %c0_9 = arith.constant 0 : index
    %9 = vector.load %arg5[%c0_8, %c0_9] : memref<1x32xf32, #tpu.memory_space<vmem>>, vector<1x32xf32>
    %cst_10 = arith.constant dense<0.000000e+00> : vector<128x32xf32>
    %10 = tpu.matmul %7, %8, %cst_10 {dimension_numbers = #tpu.dot_dimension_numbers<[1], [0], [0], [1], [0, 0, 1, 1], [], []>} : vector<128x64xf32>, vector<64x32xf32>, vector<128x32xf32> -> vector<128x32xf32>
    %11 = vector.broadcast %9 : vector<1x32xf32> to vector<128x32xf32>
    %12 = arith.addf %10, %11 : vector<128x32xf32>
    %cst_11 = arith.constant 0.000000e+00 : f32
    %13 = vector.broadcast %cst_11 : f32 to vector<128x32xf32>
    %14 = arith.maximumf %12, %13 : vector<128x32xf32>
    %c0_12 = arith.constant 0 : index
    %c0_13 = arith.constant 0 : index
    %15 = vector.load %arg6[%c0_12, %c0_13] : memref<1x32xf32, #tpu.memory_space<vmem>>, vector<1x32xf32>
    %c0_14 = arith.constant 0 : index
    %c0_15 = arith.constant 0 : index
    %16 = vector.load %arg7[%c0_14, %c0_15] : memref<1x1xf32, #tpu.memory_space<vmem>>, vector<1x1xf32>
    %cst_16 = arith.constant dense<0.000000e+00> : vector<1x128xf32>
    %17 = tpu.matmul %15, %14, %cst_16 {dimension_numbers = #tpu.dot_dimension_numbers<[1], [1], [0], [0], [0, 0, 1, 0], [], []>} : vector<1x32xf32>, vector<128x32xf32>, vector<1x128xf32> -> vector<1x128xf32>
    %18 = vector.extract %16[0, 0] : f32 from vector<1x1xf32>
    %19 = vector.broadcast %18 : f32 to vector<1x128xf32>
    %20 = arith.addf %17, %19 : vector<1x128xf32>
    %c0_17 = arith.constant 0 : index
    %c0_18 = arith.constant 0 : index
    %21 = vector.load %arg8[%c0_17, %c0_18] : memref<1x128xf32, #tpu.memory_space<vmem>>, vector<1x128xf32>
    tpu.vector_store %arg8[%c0_17, %c0_18], %20 {strides = array<i32>} : memref<1x128xf32, #tpu.memory_space<vmem>>, vector<1x128xf32>,
    return
  }
  func.func @transform_0(%arg0: i32) -> (i32, i32) {
    %c0_i32 = arith.constant 0 : i32
    %c0_i32_0 = arith.constant 0 : i32
    return %arg0, %c0_i32 : i32, i32
  }
  func.func @transform_1(%arg0: i32) -> (i32, i32) {
    %c0_i32 = arith.constant 0 : i32
    %c0_i32_0 = arith.constant 0 : i32
    %c0_i32_1 = arith.constant 0 : i32
    return %c0_i32, %c0_i32_0 : i32, i32
  }
  func.func @transform_2(%arg0: i32) -> (i32, i32) {
    %c0_i32 = arith.constant 0 : i32
    %c0_i32_0 = arith.constant 0 : i32
    %c0_i32_1 = arith.constant 0 : i32
    return %c0_i32, %c0_i32_0 : i32, i32
  }
  func.func @transform_3(%arg0: i32) -> (i32, i32) {
    %c0_i32 = arith.constant 0 : i32
    %c0_i32_0 = arith.constant 0 : i32
    %c0_i32_1 = arith.constant 0 : i32
    return %c0_i32, %c0_i32_0 : i32, i32
  }
  func.func @transform_4(%arg0: i32) -> (i32, i32) {
    %c0_i32 = arith.constant 0 : i32
    %c0_i32_0 = arith.constant 0 : i32
    %c0_i32_1 = arith.constant 0 : i32
    return %c0_i32, %c0_i32_0 : i32, i32
  }
  func.func @transform_5(%arg0: i32) -> (i32, i32) {
    %c0_i32 = arith.constant 0 : i32
    %c0_i32_0 = arith.constant 0 : i32
    %c0_i32_1 = arith.constant 0 : i32
    return %c0_i32, %c0_i32_0 : i32, i32
  }
  func.func @transform_6(%arg0: i32) -> (i32, i32) {
    %c0_i32 = arith.constant 0 : i32
    %c0_i32_0 = arith.constant 0 : i32
    %c0_i32_1 = arith.constant 0 : i32
    return %c0_i32, %c0_i32_0 : i32, i32
  }
  func.func @transform_7(%arg0: i32) -> (i32, i32) {
    %c0_i32 = arith.constant 0 : i32
    %c0_i32_0 = arith.constant 0 : i32
    return %c0_i32, %arg0 : i32, i32
  }
}

</mosaic_0001>

<llo_original>
// kernel: tpu_custom_call.1
$region0: #{tpu_custom_call.1}
  #allocation0 [shape = 'u32[]', space=smem, size = 0x4, offset = 0x4, fixed_abs, tag = 'smem constant byte address 0x4 - core index']
  #allocation1 [shape = 'u32[72,128]{1,0:T(1,128)}', space=vmem, size = 0x9000, scoped, tag = 'internal scratch']
  #allocation2 [shape = 'f32[1,1]{1,0:T(1,128)S(1)}', space=vmem, size = 0x200, scoped, tag = 'scoped memory for tpu_custom_call.1']
  %s0 = inlined_call_operand.vmem [shape: f32[128,32], index: 0, kind: input, shape index: {}]
  %s1 = inlined_call_operand.vmem [shape: f32[32,64], index: 1, kind: input, shape index: {}]
  %s2 = inlined_call_operand.vmem [shape: f32[1,64], index: 2, kind: input, shape index: {}]
  %s3 = inlined_call_operand.vmem [shape: f32[64,32], index: 3, kind: input, shape index: {}]
  %s4 = inlined_call_operand.vmem [shape: f32[1,32], index: 4, kind: input, shape index: {}]
  %s5 = inlined_call_operand.vmem [shape: f32[1,32], index: 5, kind: input, shape index: {}]
  %s6 = inlined_call_operand.<no memory space> [shape: f32[1,1], index: 6, kind: input, shape index: {}]
  %s7 = inlined_call_operand.hbm [shape: f32[1,128], index: 7, kind: output, shape index: {}]
  %s8 = sld [smem:[#allocation0]]
  $region38: #{tpu_custom_call.1} parent=0
    _
  %s10 = ssub.s32 1, %s8
  %s11 = scalar_select 0, %s10, %s8
  %v12 = vstv %s6
  %13 = vst [vmem:[#allocation2] sm:$0x1] %v12
  $region1: #{tpu_custom_call.1} parent=0
    #allocation3 [shape = 'u8[512]{0}', space=vmem, size = 0x400, scoped, tag = 'output window, operand 0, single buffered']
    #allocation4 [shape = 's32[1]{0}', space=sflag, size = 0x4, scoped, tag = 'scoped memory for tpu_custom_call.1']
    %14 = vsyncpa [#allocation4], 0
    // Predicated region
    $region2: #{tpu_custom_call.1} parent=1 // pred_check
      _
    $region3: #{tpu_custom_call.1} parent=1 // pred_check_branch
      %16 = sbr.rel (0) target = $region5
    $region4: #{tpu_custom_call.1} parent=1 // pred_region
      _
    $region5: #{tpu_custom_call.1} parent=1 // pred_fallthru
      _
    // Predicated region
    $region6: #{tpu_custom_call.1} parent=1 // pred_check
      _
    $region7: #{tpu_custom_call.1} parent=1 // pred_check_branch
      %18 = sbr.rel (0) target = $region9
    $region8: #{tpu_custom_call.1} parent=1 // pred_region
      _
    $region9: #{tpu_custom_call.1} parent=1 // pred_fallthru
      _
    // Predicated region
    $region10: #{tpu_custom_call.1} parent=1 // pred_check
      _
    $region11: #{tpu_custom_call.1} parent=1 // pred_check_branch
      %20 = sbr.rel (0) target = $region13
    $region12: #{tpu_custom_call.1} parent=1 // pred_region
      _
    $region13: #{tpu_custom_call.1} parent=1 // pred_fallthru
      _
    // Predicated region
    $region14: #{tpu_custom_call.1} parent=1 // pred_check
      _
    $region15: #{tpu_custom_call.1} parent=1 // pred_check_branch
      %22 = sbr.rel (0) target = $region17
    $region16: #{tpu_custom_call.1} parent=1 // pred_region
      _
    $region17: #{tpu_custom_call.1} parent=1 // pred_fallthru
      _
    // Predicated region
    $region18: #{tpu_custom_call.1} parent=1 // pred_check
      _
    $region19: #{tpu_custom_call.1} parent=1 // pred_check_branch
      %24 = sbr.rel (0) target = $region21
    $region20: #{tpu_custom_call.1} parent=1 // pred_region
      _
    $region21: #{tpu_custom_call.1} parent=1 // pred_fallthru
      _
    // Predicated region
    $region22: #{tpu_custom_call.1} parent=1 // pred_check
      _
    $region23: #{tpu_custom_call.1} parent=1 // pred_check_branch
      %26 = sbr.rel (0) target = $region25
    $region24: #{tpu_custom_call.1} parent=1 // pred_region
      _
    $region25: #{tpu_custom_call.1} parent=1 // pred_fallthru
      _
    // Predicated region
    $region26: #{tpu_custom_call.1} parent=1 // pred_check
      _
    $region27: #{tpu_custom_call.1} parent=1 // pred_check_branch
      %28 = sbr.rel (0) target = $region29
    $region28: #{tpu_custom_call.1} parent=1 // pred_region
      _
    $region29: #{tpu_custom_call.1} parent=1 // pred_fallthru
      _
    %v29 = vld [vmem:[%s0] sm:$0xff]
    %v30 = vld [vmem:[%s0 + $0x8] sm:$0xff]
    %v31 = vld [vmem:[%s0 + $0x10] sm:$0xff]
    %v32 = vld [vmem:[%s0 + $0x18] sm:$0xff]
    %v33 = vld [vmem:[%s0 + $0x20] sm:$0xff]
    %v34 = vld [vmem:[%s0 + $0x28] sm:$0xff]
    %v35 = vld [vmem:[%s0 + $0x30] sm:$0xff]
    %v36 = vld [vmem:[%s0 + $0x38] sm:$0xff]
    %v37 = vld [vmem:[%s0 + $0x40] sm:$0xff]
    %v38 = vld [vmem:[%s0 + $0x48] sm:$0xff]
    %v39 = vld [vmem:[%s0 + $0x50] sm:$0xff]
    %v40 = vld [vmem:[%s0 + $0x58] sm:$0xff]
    %v41 = vld [vmem:[%s0 + $0x60] sm:$0xff]
    %v42 = vld [vmem:[%s0 + $0x68] sm:$0xff]
    %v43 = vld [vmem:[%s0 + $0x70] sm:$0xff]
    %v44 = vld [vmem:[%s0 + $0x78] sm:$0xff]
    %v45 = vld [vmem:[%s1] sm:$0xff]
    %v46 = vld [vmem:[%s1 + $0x8] sm:$0xff]
    %v47 = vld [vmem:[%s1 + $0x10] sm:$0xff]
    %v48 = vld [vmem:[%s1 + $0x18] sm:$0xff]
    %v49 = vld [vmem:[%s2] sm:$0x1]
    %v51 = vperm.slane %v49, 0
    %vm53 = vcmask 261120
    %v55 = vsel %vm53, %v29, 0
    %v58 = vsel %vm53, %v30, 0
    %v61 = vsel %vm53, %v31, 0
    %v64 = vsel %vm53, %v32, 0
    %v67 = vsel %vm53, %v33, 0
    %v70 = vsel %vm53, %v34, 0
    %v73 = vsel %vm53, %v35, 0
    %v76 = vsel %vm53, %v36, 0
    %v79 = vsel %vm53, %v37, 0
    %v82 = vsel %vm53, %v38, 0
    %v85 = vsel %vm53, %v39, 0
    %v88 = vsel %vm53, %v40, 0
    %v91 = vsel %vm53, %v41, 0
    %v94 = vsel %vm53, %v42, 0
    %v97 = vsel %vm53, %v43, 0
    %v100 = vsel %vm53, %v44, 0
    %102 = vmatpush.msra.mxu0 0.0
    %103 = vmatpush.msra.mxu0 0.0
    %104 = vmatpush.msra.mxu0 0.0
    %105 = vmatpush.msra.mxu0 0.0
    %106 = vmatpush.msra.mxu0 0.0
    %107 = vmatpush.msra.mxu0 0.0
    %108 = vmatpush.msra.mxu0 0.0
    %109 = vmatpush.msra.mxu0 0.0
    %110 = vmatpush.msra.mxu0 0.0
    %111 = vmatpush.msra.mxu0 0.0
    %112 = vmatpush.msra.mxu0 0.0
    %113 = vmatpush.msra.mxu0 0.0
    %114 = vmatpush.msra.mxu0 %v48
    %115 = vmatpush.msra.mxu0 %v47
    %116 = vmatpush.msra.mxu0 %v46
    %117 = vmatpush.msra.mxu0 %v45
    %118 = vmatmul.f32.gmra.mxu0 %v55
    %v119 = vpop.f32.mrf.mxu0
    %v120 = vadd.f32 %v51, %v119
    %121 = vmatmul.f32.gmra.mxu0 %v58
    %v122 = vpop.f32.mrf.mxu0
    %v123 = vadd.f32 %v51, %v122
    %124 = vmatmul.f32.gmra.mxu0 %v61
    %v125 = vpop.f32.mrf.mxu0
    %v126 = vadd.f32 %v51, %v125
    %127 = vmatmul.f32.gmra.mxu0 %v64
    %v128 = vpop.f32.mrf.mxu0
    %v129 = vadd.f32 %v51, %v128
    %130 = vmatmul.f32.gmra.mxu0 %v67
    %v131 = vpop.f32.mrf.mxu0
    %v132 = vadd.f32 %v51, %v131
    %133 = vmatmul.f32.gmra.mxu0 %v70
    %v134 = vpop.f32.mrf.mxu0
    %v135 = vadd.f32 %v51, %v134
    %136 = vmatmul.f32.gmra.mxu0 %v73
    %v137 = vpop.f32.mrf.mxu0
    %v138 = vadd.f32 %v51, %v137
    %139 = vmatmul.f32.gmra.mxu0 %v76
    %v140 = vpop.f32.mrf.mxu0
    %v141 = vadd.f32 %v51, %v140
    %142 = vmatmul.f32.gmra.mxu0 %v79
    %v143 = vpop.f32.mrf.mxu0
    %v144 = vadd.f32 %v51, %v143
    %145 = vmatmul.f32.gmra.mxu0 %v82
    %v146 = vpop.f32.mrf.mxu0
    %v147 = vadd.f32 %v51, %v146
    %148 = vmatmul.f32.gmra.mxu0 %v85
    %v149 = vpop.f32.mrf.mxu0
    %v150 = vadd.f32 %v51, %v149
    %151 = vmatmul.f32.gmra.mxu0 %v88
    %v152 = vpop.f32.mrf.mxu0
    %v153 = vadd.f32 %v51, %v152
    %154 = vmatmul.f32.gmra.mxu0 %v91
    %v155 = vpop.f32.mrf.mxu0
    %v156 = vadd.f32 %v51, %v155
    %157 = vmatmul.f32.gmra.mxu0 %v94
    %v158 = vpop.f32.mrf.mxu0
    %v159 = vadd.f32 %v51, %v158
    %160 = vmatmul.f32.gmra.mxu0 %v97
    %v161 = vpop.f32.mrf.mxu0
    %v162 = vadd.f32 %v51, %v161
    %163 = vmatmul.f32.gmra.mxu0 %v100
    %v164 = vpop.f32.mrf.mxu0
    %v165 = vadd.f32 %v51, %v164
    %166 = vdwg.mxu0
    %v167 = vmax.f32 %v120, 0.0
    %v168 = vmax.f32 %v123, 0.0
    %v169 = vmax.f32 %v126, 0.0
    %v170 = vmax.f32 %v129, 0.0
    %v171 = vmax.f32 %v132, 0.0
    %v172 = vmax.f32 %v135, 0.0
    %v173 = vmax.f32 %v138, 0.0
    %v174 = vmax.f32 %v141, 0.0
    %v175 = vmax.f32 %v144, 0.0
    %v176 = vmax.f32 %v147, 0.0
    %v177 = vmax.f32 %v150, 0.0
    %v178 = vmax.f32 %v153, 0.0
    %v179 = vmax.f32 %v156, 0.0
    %v180 = vmax.f32 %v159, 0.0
    %v181 = vmax.f32 %v162, 0.0
    %v182 = vmax.f32 %v165, 0.0
    %v183 = vld [vmem:[%s3] sm:$0xff]
    %v184 = vld [vmem:[%s3 + $0x8] sm:$0xff]
    %v185 = vld [vmem:[%s3 + $0x10] sm:$0xff]
    %v186 = vld [vmem:[%s3 + $0x18] sm:$0xff]
    %v187 = vld [vmem:[%s3 + $0x20] sm:$0xff]
    %v188 = vld [vmem:[%s3 + $0x28] sm:$0xff]
    %v189 = vld [vmem:[%s3 + $0x30] sm:$0xff]
    %v190 = vld [vmem:[%s3 + $0x38] sm:$0xff]
    %v191 = vld [vmem:[%s4] sm:$0x1]
    %v193 = vperm.slane %v191, 0
    %vm195 = vcmask 523264
    %v197 = vsel %vm195, %v167, 0
    %v200 = vsel %vm195, %v168, 0
    %v203 = vsel %vm195, %v169, 0
    %v206 = vsel %vm195, %v170, 0
    %v209 = vsel %vm195, %v171, 0
    %v212 = vsel %vm195, %v172, 0
    %v215 = vsel %vm195, %v173, 0
    %v218 = vsel %vm195, %v174, 0
    %v221 = vsel %vm195, %v175, 0
    %v224 = vsel %vm195, %v176, 0
    %v227 = vsel %vm195, %v177, 0
    %v230 = vsel %vm195, %v178, 0
    %v233 = vsel %vm195, %v179, 0
    %v236 = vsel %vm195, %v180, 0
    %v239 = vsel %vm195, %v181, 0
    %v242 = vsel %vm195, %v182, 0
    %244 = vmatpush.msra.mxu0 0.0
    %245 = vmatpush.msra.mxu0 0.0
    %246 = vmatpush.msra.mxu0 0.0
    %247 = vmatpush.msra.mxu0 0.0
    %248 = vmatpush.msra.mxu0 0.0
    %249 = vmatpush.msra.mxu0 0.0
    %250 = vmatpush.msra.mxu0 0.0
    %251 = vmatpush.msra.mxu0 0.0
    %252 = vmatpush.msra.mxu0 %v190
    %253 = vmatpush.msra.mxu0 %v189
    %254 = vmatpush.msra.mxu0 %v188
    %255 = vmatpush.msra.mxu0 %v187
    %256 = vmatpush.msra.mxu0 %v186
    %257 = vmatpush.msra.mxu0 %v185
    %258 = vmatpush.msra.mxu0 %v184
    %259 = vmatpush.msra.mxu0 %v183
    %260 = vmatmul.f32.gmra.mxu0 %v197
    %v261 = vpop.f32.mrf.mxu0
    %v262 = vadd.f32 %v193, %v261
    %263 = vmatmul.f32.gmra.mxu0 %v200
    %v264 = vpop.f32.mrf.mxu0
    %v265 = vadd.f32 %v193, %v264
    %266 = vmatmul.f32.gmra.mxu0 %v203
    %v267 = vpop.f32.mrf.mxu0
    %v268 = vadd.f32 %v193, %v267
    %269 = vmatmul.f32.gmra.mxu0 %v206
    %v270 = vpop.f32.mrf.mxu0
    %v271 = vadd.f32 %v193, %v270
    %272 = vmatmul.f32.gmra.mxu0 %v209
    %v273 = vpop.f32.mrf.mxu0
    %v274 = vadd.f32 %v193, %v273
    %275 = vmatmul.f32.gmra.mxu0 %v212
    %v276 = vpop.f32.mrf.mxu0
    %v277 = vadd.f32 %v193, %v276
    %278 = vmatmul.f32.gmra.mxu0 %v215
    %v279 = vpop.f32.mrf.mxu0
    %v280 = vadd.f32 %v193, %v279
    %281 = vmatmul.f32.gmra.mxu0 %v218
    %v282 = vpop.f32.mrf.mxu0
    %v283 = vadd.f32 %v193, %v282
    %284 = vmatmul.f32.gmra.mxu0 %v221
    %v285 = vpop.f32.mrf.mxu0
    %v286 = vadd.f32 %v193, %v285
    %287 = vmatmul.f32.gmra.mxu0 %v224
    %v288 = vpop.f32.mrf.mxu0
    %v289 = vadd.f32 %v193, %v288
    %290 = vmatmul.f32.gmra.mxu0 %v227
    %v291 = vpop.f32.mrf.mxu0
    %v292 = vadd.f32 %v193, %v291
    %293 = vmatmul.f32.gmra.mxu0 %v230
    %v294 = vpop.f32.mrf.mxu0
    %v295 = vadd.f32 %v193, %v294
    %296 = vmatmul.f32.gmra.mxu0 %v233
    %v297 = vpop.f32.mrf.mxu0
    %v298 = vadd.f32 %v193, %v297
    %299 = vmatmul.f32.gmra.mxu0 %v236
    %v300 = vpop.f32.mrf.mxu0
    %v301 = vadd.f32 %v193, %v300
    %302 = vmatmul.f32.gmra.mxu0 %v239
    %v303 = vpop.f32.mrf.mxu0
    %v304 = vadd.f32 %v193, %v303
    %305 = vmatmul.f32.gmra.mxu0 %v242
    %v306 = vpop.f32.mrf.mxu0
    %v307 = vadd.f32 %v193, %v306
    %308 = vdwg.mxu0
    %v309 = vmax.f32 %v262, 0.0
    %v310 = vmax.f32 %v265, 0.0
    %v311 = vmax.f32 %v268, 0.0
    %v312 = vmax.f32 %v271, 0.0
    %v313 = vmax.f32 %v274, 0.0
    %v314 = vmax.f32 %v277, 0.0
    %v315 = vmax.f32 %v280, 0.0
    %v316 = vmax.f32 %v283, 0.0
    %v317 = vmax.f32 %v286, 0.0
    %v318 = vmax.f32 %v289, 0.0
    %v319 = vmax.f32 %v292, 0.0
    %v320 = vmax.f32 %v295, 0.0
    %v321 = vmax.f32 %v298, 0.0
    %v322 = vmax.f32 %v301, 0.0
    %v323 = vmax.f32 %v304, 0.0
    %v324 = vmax.f32 %v307, 0.0
    %v325 = vld [vmem:[%s5] sm:$0x1]
    %v326 = vld [vmem:[#allocation2] sm:$0x1]
    %s327 = vtos %v326
    %v328 = vstv %s327
    %v330 = vsel %vm53, %v325, 0
    %v333 = vsel %vm53, %v309, 0
    %v336 = vsel %vm53, %v310, 0
    %v339 = vsel %vm53, %v311, 0
    %v342 = vsel %vm53, %v312, 0
    %v345 = vsel %vm53, %v313, 0
    %v348 = vsel %vm53, %v314, 0
    %v351 = vsel %vm53, %v315, 0
    %v354 = vsel %vm53, %v316, 0
    %v357 = vsel %vm53, %v317, 0
    %v360 = vsel %vm53, %v318, 0
    %v363 = vsel %vm53, %v319, 0
    %v366 = vsel %vm53, %v320, 0
    %v369 = vsel %vm53, %v321, 0
    %v372 = vsel %vm53, %v322, 0
    %v375 = vsel %vm53, %v323, 0
    %v378 = vsel %vm53, %v324, 0
    %380 = vmatpush.xpose.msra.mxu0 %v378
    %381 = vmatpush.xpose.msra.mxu0 %v375
    %382 = vmatpush.xpose.msra.mxu0 %v372
    %383 = vmatpush.xpose.msra.mxu0 %v369
    %384 = vmatpush.xpose.msra.mxu0 %v366
    %385 = vmatpush.xpose.msra.mxu0 %v363
    %386 = vmatpush.xpose.msra.mxu0 %v360
    %387 = vmatpush.xpose.msra.mxu0 %v357
    %388 = vmatpush.xpose.msra.mxu0 %v354
    %389 = vmatpush.xpose.msra.mxu0 %v351
    %390 = vmatpush.xpose.msra.mxu0 %v348
    %391 = vmatpush.xpose.msra.mxu0 %v345
    %392 = vmatpush.xpose.msra.mxu0 %v342
    %393 = vmatpush.xpose.msra.mxu0 %v339
    %394 = vmatpush.xpose.msra.mxu0 %v336
    %395 = vmatpush.xpose.msra.mxu0 %v333
    %396 = vmatmul.f32.gmra.mxu0 %v330
    %v397 = vpop.f32.mrf.mxu0
    %v398 = vadd.f32 %v328, %v397
    %399 = vdwg.mxu0
    %400 = vst [vmem:[#allocation3] sm:$0x1] %v398
    // Predicated region
    $region30: #{tpu_custom_call.1} parent=1 // pred_check
      _
    $region31: #{tpu_custom_call.1} parent=1 // pred_check_branch
      %402 = sbr.rel (0) target = $region33
    $region32: #{tpu_custom_call.1} parent=1 // pred_region
      %404 = vsyncadd [#allocation4], 0
      %s406 = sshll.u32 [#allocation3], 4
      %s407 = int_to_ptr.vmem [resolvable:$true] %s406
      %s408 = sshll.u32 %s7, 4
      %s409 = int_to_ptr.hbm [resolvable:$true] %s408
      %411 = dma.vmem_to_hbm [thread:$0]  %s407, 16, %s409, [#allocation4]
    $region33: #{tpu_custom_call.1} parent=1 // pred_fallthru
      _
    // Predicated region
    $region34: #{tpu_custom_call.1} parent=1 // pred_check
      _
    $region35: #{tpu_custom_call.1} parent=1 // pred_check_branch
      %413 = sbr.rel (0) target = $region37
    $region36: #{tpu_custom_call.1} parent=1 // pred_region
      %415 = dma.done [#allocation4], 16
    $region37: #{tpu_custom_call.1} parent=1 // pred_fallthru
      _
    %416 = vsyncpa [#allocation4], 1

</llo_original>
